<compile_context>
chip_gen: v7x
topology: tpu7x:2x2x1
jax: 0.10.0
libtpu: 0.0.40
codegen_flags: <defaults>
</compile_context>

<pallas_src>
import jax
import jax.numpy as jnp
from jax.experimental import pallas as pl
from jax.experimental.pallas import tpu as pltpu


def polarnet_kernel(x_ref, w1c0_ref, w1c1_ref, b1_ref, w2_ref, b2_ref, out_ref):
    # x_ref: (2, TN); w1c0/w1c1/b1/w2: (H, 1) in VMEM; b2: (1, 1) in SMEM;
    # out_ref: (1, TN).  Batch sits on the lane axis everywhere.
    x0 = x_ref[0:1, :]                               # (1, TN)
    x1 = x_ref[1:2, :]                               # (1, TN)

    # polar transform (VPU / EUP), full 128-lane vregs
    r = jnp.sqrt(x0 * x0 + x1 * x1)                  # (1, TN)
    a = jnp.arctan2(x1, x0)                          # (1, TN)

    # hidden layer: broadcast FMAs, (H,1)*(1,TN) -> (H, TN); no MXU involved
    h = jnp.tanh(w1c0_ref[...] * r + w1c1_ref[...] * a + b1_ref[...])

    # output layer: multiply + sublane reduction over H, plus SMEM scalar bias
    z = jnp.sum(h * w2_ref[...], axis=0, keepdims=True) + b2_ref[0, 0]  # (1, TN)

    # sigmoid(z) == 0.5 * tanh(0.5 * z) + 0.5  (exact identity, single EUP op)
    out_ref[...] = (0.5 * jnp.tanh(0.5 * z) + 0.5).astype(out_ref.dtype)


def polarnet_forward(x, w1, b1, w2, b2, *, tn=2048):
    """PolarNet forward.

    x:  (N, 2) float32
    w1: (H, 2), b1: (H,)   -- PyTorch nn.Linear(2, H) layout
    w2: (1, H), b2: (1,)   -- PyTorch nn.Linear(H, 1) layout
    Returns (N, 1) float32.
    """
    n = x.shape[0]
    h = w1.shape[0]
    assert tn % 128 == 0, "tile size must be a multiple of the 128-lane width"

    n_pad = pl.cdiv(n, tn) * tn
    # Lane-dense layout: batch on the last axis, zero-padded tail.
    x_t = jnp.zeros((2, n_pad), jnp.float32).at[:, :n].set(
        jnp.asarray(x, jnp.float32).T)

    w1c0 = jnp.asarray(w1[:, 0], jnp.float32).reshape(h, 1)
    w1c1 = jnp.asarray(w1[:, 1], jnp.float32).reshape(h, 1)
    b1c = jnp.asarray(b1, jnp.float32).reshape(h, 1)
    w2c = jnp.asarray(w2, jnp.float32).reshape(h, 1)
    b2s = jnp.asarray(b2, jnp.float32).reshape(1, 1)

    const = lambda i: (0, 0)   # weights/biases: same block every grid step
    out_t = pl.pallas_call(
        polarnet_kernel,
        out_shape=jax.ShapeDtypeStruct((1, n_pad), jnp.float32),
        grid_spec=pltpu.PrefetchScalarGridSpec(
            num_scalar_prefetch=0,
            grid=(n_pad // tn,),
            in_specs=[
                pl.BlockSpec((2, tn), lambda i: (0, i)),            # x tile
                pl.BlockSpec((h, 1), const),                        # w1[:, 0]
                pl.BlockSpec((h, 1), const),                        # w1[:, 1]
                pl.BlockSpec((h, 1), const),                        # b1
                pl.BlockSpec((h, 1), const),                        # w2
                pl.BlockSpec(memory_space=pltpu.MemorySpace.SMEM),  # b2 scalar
            ],
            out_specs=pl.BlockSpec((1, tn), lambda i: (0, i)),
        ),
        compiler_params=pltpu.CompilerParams(
            dimension_semantics=("parallel",)),
    )(x_t, w1c0, w1c1, b1c, w2c, b2s)
    return out_t[0, :n].reshape(n, 1)


def init_params(key, num_hid):
    # Deterministic init mimicking nn.Linear's U(-1/sqrt(fan_in), 1/sqrt(fan_in)),
    # stored in PyTorch layouts: W (out, in), b (out,).
    k1, k2, k3, k4 = jax.random.split(key, 4)
    lim1 = 1.0 / jnp.sqrt(2.0)
    lim2 = 1.0 / jnp.sqrt(float(num_hid))
    w1 = jax.random.uniform(k1, (num_hid, 2), jnp.float32, -lim1, lim1)
    b1 = jax.random.uniform(k2, (num_hid,), jnp.float32, -lim1, lim1)
    w2 = jax.random.uniform(k3, (1, num_hid), jnp.float32, -lim2, lim2)
    b2 = jax.random.uniform(k4, (1,), jnp.float32, -lim2, lim2)
    return w1, b1, w2, b2


def polarnet_reference(x, w1, b1, w2, b2):
    r = jnp.sqrt(x[:, 0] * x[:, 0] + x[:, 1] * x[:, 1]).reshape(-1, 1)
    a = jnp.arctan2(x[:, 1], x[:, 0]).reshape(-1, 1)
    feat = jnp.concatenate([r, a], axis=1)
    hid = jnp.tanh(feat @ w1.T + b1)
    return jax.nn.sigmoid(hid @ w2.T + b2)


if __name__ == "__main__":
    num_hid = 32
    batch = 300   # exercises zero-padding (300 -> 384) and a multi-step grid

    key = jax.random.PRNGKey(0)
    kx, kp = jax.random.split(key)
    x = jax.random.normal(kx, (batch, 2), jnp.float32)
    w1, b1, w2, b2 = init_params(kp, num_hid)

    out = polarnet_forward(x, w1, b1, w2, b2, tn=128)
    out = jax.block_until_ready(out)

    ref = polarnet_reference(x, w1, b1, w2, b2)
    assert out.shape == (batch, 1)
    assert jnp.allclose(out, ref, atol=1e-5, rtol=1e-5)

    print("KERNEL_OK")
</pallas_src>

<mosaic_0001>
module attributes {stable_mosaic.version = 11 : i64} {
  func.func @polarnet_kernel(%arg0: i32, %arg1: memref<2x128xf32, #tpu.memory_space<vmem>>, %arg2: memref<32x1xf32, #tpu.memory_space<vmem>>, %arg3: memref<32x1xf32, #tpu.memory_space<vmem>>, %arg4: memref<32x1xf32, #tpu.memory_space<vmem>>, %arg5: memref<32x1xf32, #tpu.memory_space<vmem>>, %arg6: memref<1x1xf32, #tpu.memory_space<smem>>, %arg7: memref<1x128xf32, #tpu.memory_space<vmem>>) attributes {dimension_semantics = [#tpu.dimension_semantics<parallel>], iteration_bounds = array<i64: 3>, scalar_prefetch = 0 : i64, scratch_operands = 0 : i64, tpu.core_type = #tpu.core_type<tc>, window_params = [{transform_indices = @transform_0, window_bounds = array<i64: 2, 128>}, {pipeline_mode = #tpu.pipeline_mode<synchronous>, transform_indices = @transform_1, window_bounds = array<i64: 32, 1>}, {pipeline_mode = #tpu.pipeline_mode<synchronous>, transform_indices = @transform_2, window_bounds = array<i64: 32, 1>}, {pipeline_mode = #tpu.pipeline_mode<synchronous>, transform_indices = @transform_3, window_bounds = array<i64: 32, 1>}, {pipeline_mode = #tpu.pipeline_mode<synchronous>, transform_indices = @transform_4, window_bounds = array<i64: 32, 1>}, {transform_indices = @transform_5, window_bounds = array<i64: 1, 1>}, {transform_indices = @transform_6, window_bounds = array<i64: 1, 128>}]} {
    %c0 = arith.constant 0 : index
    %c0_0 = arith.constant 0 : index
    %0 = vector.load %arg1[%c0, %c0_0] : memref<2x128xf32, #tpu.memory_space<vmem>>, vector<1x128xf32>
    %c1 = arith.constant 1 : index
    %c0_1 = arith.constant 0 : index
    %1 = vector.load %arg1[%c1, %c0_1] : memref<2x128xf32, #tpu.memory_space<vmem>>, vector<1x128xf32>
    %2 = arith.mulf %0, %0 : vector<1x128xf32>
    %3 = arith.mulf %1, %1 : vector<1x128xf32>
    %4 = arith.addf %2, %3 : vector<1x128xf32>
    %5 = math.sqrt %4 : vector<1x128xf32>
    %6 = math.atan2 %1, %0 : vector<1x128xf32>
    %c0_2 = arith.constant 0 : index
    %c0_3 = arith.constant 0 : index
    %7 = vector.load %arg2[%c0_2, %c0_3] : memref<32x1xf32, #tpu.memory_space<vmem>>, vector<32x1xf32>
    %8 = vector.broadcast %7 : vector<32x1xf32> to vector<32x128xf32>
    %9 = vector.broadcast %5 : vector<1x128xf32> to vector<32x128xf32>
    %10 = arith.mulf %8, %9 : vector<32x128xf32>
    %c0_4 = arith.constant 0 : index
    %c0_5 = arith.constant 0 : index
    %11 = vector.load %arg3[%c0_4, %c0_5] : memref<32x1xf32, #tpu.memory_space<vmem>>, vector<32x1xf32>
    %12 = vector.broadcast %11 : vector<32x1xf32> to vector<32x128xf32>
    %13 = vector.broadcast %6 : vector<1x128xf32> to vector<32x128xf32>
    %14 = arith.mulf %12, %13 : vector<32x128xf32>
    %15 = arith.addf %10, %14 : vector<32x128xf32>
    %c0_6 = arith.constant 0 : index
    %c0_7 = arith.constant 0 : index
    %16 = vector.load %arg4[%c0_6, %c0_7] : memref<32x1xf32, #tpu.memory_space<vmem>>, vector<32x1xf32>
    %17 = vector.broadcast %16 : vector<32x1xf32> to vector<32x128xf32>
    %18 = arith.addf %15, %17 : vector<32x128xf32>
    %19 = math.tanh %18 : vector<32x128xf32>
    %c0_8 = arith.constant 0 : index
    %c0_9 = arith.constant 0 : index
    %20 = vector.load %arg5[%c0_8, %c0_9] : memref<32x1xf32, #tpu.memory_space<vmem>>, vector<32x1xf32>
    %21 = vector.broadcast %20 : vector<32x1xf32> to vector<32x128xf32>
    %22 = arith.mulf %19, %21 : vector<32x128xf32>
    %cst = arith.constant dense<0.000000e+00> : vector<128xf32>
    %23 = vector.multi_reduction <add>, %22, %cst [0] : vector<32x128xf32> to vector<128xf32>
    %24 = vector.shape_cast %23 : vector<128xf32> to vector<1x128xf32>
    %c0_10 = arith.constant 0 : index
    %c0_11 = arith.constant 0 : index
    %25 = memref.load %arg6[%c0_10, %c0_11] : memref<1x1xf32, #tpu.memory_space<smem>>
    %26 = vector.broadcast %25 : f32 to vector<1x128xf32>
    %27 = arith.addf %24, %26 : vector<1x128xf32>
    %cst_12 = arith.constant 5.000000e-01 : f32
    %28 = vector.broadcast %cst_12 : f32 to vector<1x128xf32>
    %29 = arith.mulf %28, %27 : vector<1x128xf32>
    %30 = math.tanh %29 : vector<1x128xf32>
    %cst_13 = arith.constant 5.000000e-01 : f32
    %31 = vector.broadcast %cst_13 : f32 to vector<1x128xf32>
    %32 = arith.mulf %31, %30 : vector<1x128xf32>
    %cst_14 = arith.constant 5.000000e-01 : f32
    %33 = vector.broadcast %cst_14 : f32 to vector<1x128xf32>
    %34 = arith.addf %32, %33 : vector<1x128xf32>
    %c0_15 = arith.constant 0 : index
    %c0_16 = arith.constant 0 : index
    %35 = vector.load %arg7[%c0_15, %c0_16] : memref<1x128xf32, #tpu.memory_space<vmem>>, vector<1x128xf32>
    tpu.vector_store %arg7[%c0_15, %c0_16], %34 {strides = array<i32>} : memref<1x128xf32, #tpu.memory_space<vmem>>, vector<1x128xf32>,
    return
  }
  func.func @transform_0(%arg0: i32) -> (i32, i32) {
    %c0_i32 = arith.constant 0 : i32
    %c0_i32_0 = arith.constant 0 : i32
    return %c0_i32, %arg0 : i32, i32
  }
  func.func @transform_1(%arg0: i32) -> (i32, i32) {
    %c0_i32 = arith.constant 0 : i32
    %c0_i32_0 = arith.constant 0 : i32
    %c0_i32_1 = arith.constant 0 : i32
    return %c0_i32, %c0_i32_0 : i32, i32
  }
  func.func @transform_2(%arg0: i32) -> (i32, i32) {
    %c0_i32 = arith.constant 0 : i32
    %c0_i32_0 = arith.constant 0 : i32
    %c0_i32_1 = arith.constant 0 : i32
    return %c0_i32, %c0_i32_0 : i32, i32
  }
  func.func @transform_3(%arg0: i32) -> (i32, i32) {
    %c0_i32 = arith.constant 0 : i32
    %c0_i32_0 = arith.constant 0 : i32
    %c0_i32_1 = arith.constant 0 : i32
    return %c0_i32, %c0_i32_0 : i32, i32
  }
  func.func @transform_4(%arg0: i32) -> (i32, i32) {
    %c0_i32 = arith.constant 0 : i32
    %c0_i32_0 = arith.constant 0 : i32
    %c0_i32_1 = arith.constant 0 : i32
    return %c0_i32, %c0_i32_0 : i32, i32
  }
  func.func @transform_5(%arg0: i32) -> (i32, i32) {
    %c0_i32 = arith.constant 0 : i32
    %c0_i32_0 = arith.constant 0 : i32
    %c0_i32_1 = arith.constant 0 : i32
    return %c0_i32, %c0_i32_0 : i32, i32
  }
  func.func @transform_6(%arg0: i32) -> (i32, i32) {
    %c0_i32 = arith.constant 0 : i32
    %c0_i32_0 = arith.constant 0 : i32
    return %c0_i32, %arg0 : i32, i32
  }
}

</mosaic_0001>

<llo_original>
// kernel: tpu_custom_call.1
$region0: #{tpu_custom_call.1}
  #allocation0 [shape = 'u32[]', space=smem, size = 0x4, offset = 0x4, fixed_abs, tag = 'smem constant byte address 0x4 - core index']
  #allocation1 [shape = 'u32[144,128]{1,0:T(1,128)}', space=vmem, size = 0x12000, scoped, tag = 'internal scratch']
  #allocation2 [shape = 'f32[1,1]{1,0:T(1,128)S(6)}', space=smem, size = 0x200, scoped, tag = 'scoped memory for tpu_custom_call.1']
  %s0 = inlined_call_operand.vmem [shape: f32[2,384], index: 0, kind: input, shape index: {}]
  %s1 = inlined_call_operand.vmem [shape: f32[32,1], index: 1, kind: input, shape index: {}]
  %s2 = inlined_call_operand.vmem [shape: f32[32,1], index: 2, kind: input, shape index: {}]
  %s3 = inlined_call_operand.vmem [shape: f32[32,1], index: 3, kind: input, shape index: {}]
  %s4 = inlined_call_operand.vmem [shape: f32[32,1], index: 4, kind: input, shape index: {}]
  %s5 = inlined_call_operand.<no memory space> [shape: f32[1,1], index: 5, kind: input, shape index: {}]
  %s6 = inlined_call_operand.hbm [shape: f32[1,384], index: 6, kind: output, shape index: {}]
  %s7 = sld [smem:[#allocation0]]
  $region57: #{tpu_custom_call.1} parent=0
    _
  %s9 = ssub.s32 1, %s7
  %s10 = scalar_select 0, %s9, %s7
  %11 = sst [smem:[#allocation2]] %s5
  $region1: #{tpu_custom_call.1} parent=0
    #allocation3 [shape = 'u8[1024]{0}', space=vmem, size = 0x400, scoped, tag = 'output window, operand 0']
    #allocation4 [shape = 's32[2]{0}', space=sflag, size = 0x8, scoped, tag = 'scoped memory for tpu_custom_call.1']
    %12 = vsyncpa [#allocation4], 0
    %s13 = scalar_lea.sflag [#allocation4], 1
    %14 = vsyncpa %s13, 0
    loop: start=0, step=1, limit=5
    $region2: #{tpu_custom_call.1} parent=1 // loop_pre_header
      _
    $region3: #{tpu_custom_call.1} parent=1 // loop_header
      %s16 = sphi 0, %s20
      %p17 = scmp.ge.s32.totalorder %s16, 5
      %s26 = sphi 0, %s28
      %s29 = sphi 0, %s26
      %s30 = sphi 0, %s29
      %s46 = sphi 0, %s30
      %s50 = sphi 0, %s50
      %s52 = sphi 0, %s50
      %s53 = sphi 0, %s52
      %s67 = sphi 0, %s53
      %s71 = sphi 0, %s71
      %s73 = sphi 0, %s71
      %s74 = sphi 0, %s73
      %s88 = sphi 0, %s74
      %s92 = sphi 0, %s92
      %s94 = sphi 0, %s92
      %s95 = sphi 0, %s94
      %s109 = sphi 0, %s95
      %s113 = sphi 0, %s113
      %s115 = sphi 0, %s113
      %s116 = sphi 0, %s115
      %s130 = sphi 0, %s116
      %s134 = sphi 0, %s134
      %s136 = sphi 0, %s134
      %s137 = sphi 0, %s136
      %s151 = sphi 0, %s137
      %s157 = sphi 0, %s159
      %s160 = sphi 0, %s157
      %s161 = sphi 0, %s160
      %s177 = sphi 0, %s161
    $region4: #{tpu_custom_call.1} parent=1 // loop_header_branch
      %19 = sbr.rel (%p17) target = $region8
    $region5: #{tpu_custom_call.1} parent=1 // loop_body
      %s21 = ssub.s32 %s16, 1
      %s22 = ssub.s32 %s16, 2
      %s23 = sadd.s32 %s16, 1
      %s24 = ssub.s32 %s16, %s23
      %p25 = scmp.eq.s32.totalorder %s24, 0
      %s27 = sadd.s32 %s26, 1
      %s28 = scalar_select %p25, %s26, %s27
      %p31 = pneg %p25
      %p32 = scmp.eq.s32.totalorder %s16, 2
      %p33 = por %p31, %p32
      %p34 = scmp.ne.s32.totalorder %s26, %s29
      %p35 = scmp.eq.s32.totalorder %s16, 0
      %p36 = por %p34, %p35
      %p37 = scmp.ne.s32.totalorder %s26, %s29
      %p38 = scmp.eq.s32.totalorder %s21, 2
      %p39 = por %p37, %p38
      %p40 = scmp.ne.s32.totalorder %s29, %s30
      %p41 = scmp.eq.s32.totalorder %s21, 0
      %p42 = por %p40, %p41
      %p43 = scmp.ne.s32.totalorder %s29, %s30
      %p44 = scmp.eq.s32.totalorder %s22, 2
      %p45 = por %p43, %p44
      %p47 = scmp.ne.s32.totalorder %s30, %s46
      %p48 = scmp.eq.s32.totalorder %s22, 0
      %p49 = por %p47, %p48
      %s51 = sadd.s32 %s50, 1
      %p54 = scmp.eq.s32.totalorder %s16, 2
      %p55 = scmp.ne.s32.totalorder %s50, %s52
      %p56 = scmp.eq.s32.totalorder %s16, 0
      %p57 = por %p55, %p56
      %p58 = scmp.ne.s32.totalorder %s50, %s52
      %p59 = scmp.eq.s32.totalorder %s21, 2
      %p60 = por %p58, %p59
      %p61 = scmp.ne.s32.totalorder %s52, %s53
      %p62 = scmp.eq.s32.totalorder %s21, 0
      %p63 = por %p61, %p62
      %p64 = scmp.ne.s32.totalorder %s52, %s53
      %p65 = scmp.eq.s32.totalorder %s22, 2
      %p66 = por %p64, %p65
      %p68 = scmp.ne.s32.totalorder %s53, %s67
      %p69 = scmp.eq.s32.totalorder %s22, 0
      %p70 = por %p68, %p69
      %s72 = sadd.s32 %s71, 1
      %p75 = scmp.eq.s32.totalorder %s16, 2
      %p76 = scmp.ne.s32.totalorder %s71, %s73
      %p77 = scmp.eq.s32.totalorder %s16, 0
      %p78 = por %p76, %p77
      %p79 = scmp.ne.s32.totalorder %s71, %s73
      %p80 = scmp.eq.s32.totalorder %s21, 2
      %p81 = por %p79, %p80
      %p82 = scmp.ne.s32.totalorder %s73, %s74
      %p83 = scmp.eq.s32.totalorder %s21, 0
      %p84 = por %p82, %p83
      %p85 = scmp.ne.s32.totalorder %s73, %s74
      %p86 = scmp.eq.s32.totalorder %s22, 2
      %p87 = por %p85, %p86
      %p89 = scmp.ne.s32.totalorder %s74, %s88
      %p90 = scmp.eq.s32.totalorder %s22, 0
      %p91 = por %p89, %p90
      %s93 = sadd.s32 %s92, 1
      %p96 = scmp.eq.s32.totalorder %s16, 2
      %p97 = scmp.ne.s32.totalorder %s92, %s94
      %p98 = scmp.eq.s32.totalorder %s16, 0
      %p99 = por %p97, %p98
      %p100 = scmp.ne.s32.totalorder %s92, %s94
      %p101 = scmp.eq.s32.totalorder %s21, 2
      %p102 = por %p100, %p101
      %p103 = scmp.ne.s32.totalorder %s94, %s95
      %p104 = scmp.eq.s32.totalorder %s21, 0
      %p105 = por %p103, %p104
      %p106 = scmp.ne.s32.totalorder %s94, %s95
      %p107 = scmp.eq.s32.totalorder %s22, 2
      %p108 = por %p106, %p107
      %p110 = scmp.ne.s32.totalorder %s95, %s109
      %p111 = scmp.eq.s32.totalorder %s22, 0
      %p112 = por %p110, %p111
      %s114 = sadd.s32 %s113, 1
      %p117 = scmp.eq.s32.totalorder %s16, 2
      %p118 = scmp.ne.s32.totalorder %s113, %s115
      %p119 = scmp.eq.s32.totalorder %s16, 0
      %p120 = por %p118, %p119
      %p121 = scmp.ne.s32.totalorder %s113, %s115
      %p122 = scmp.eq.s32.totalorder %s21, 2
      %p123 = por %p121, %p122
      %p124 = scmp.ne.s32.totalorder %s115, %s116
      %p125 = scmp.eq.s32.totalorder %s21, 0
      %p126 = por %p124, %p125
      %p127 = scmp.ne.s32.totalorder %s115, %s116
      %p128 = scmp.eq.s32.totalorder %s22, 2
      %p129 = por %p127, %p128
      %p131 = scmp.ne.s32.totalorder %s116, %s130
      %p132 = scmp.eq.s32.totalorder %s22, 0
      %p133 = por %p131, %p132
      %s135 = sadd.s32 %s134, 1
      %p138 = scmp.eq.s32.totalorder %s16, 2
      %p139 = scmp.ne.s32.totalorder %s134, %s136
      %p140 = scmp.eq.s32.totalorder %s16, 0
      %p141 = por %p139, %p140
      %p142 = scmp.ne.s32.totalorder %s134, %s136
      %p143 = scmp.eq.s32.totalorder %s21, 2
      %p144 = por %p142, %p143
      %p145 = scmp.ne.s32.totalorder %s136, %s137
      %p146 = scmp.eq.s32.totalorder %s21, 0
      %p147 = por %p145, %p146
      %p148 = scmp.ne.s32.totalorder %s136, %s137
      %p149 = scmp.eq.s32.totalorder %s22, 2
      %p150 = por %p148, %p149
      %p152 = scmp.ne.s32.totalorder %s137, %s151
      %p153 = scmp.eq.s32.totalorder %s22, 0
      %p154 = por %p152, %p153
      %s155 = ssub.s32 %s16, %s23
      %p156 = scmp.eq.s32.totalorder %s155, 0
      %s158 = sadd.s32 %s157, 1
      %s159 = scalar_select %p156, %s157, %s158
      %p162 = pneg %p156
      %p163 = scmp.eq.s32.totalorder %s16, 2
      %p164 = por %p162, %p163
      %p165 = scmp.ne.s32.totalorder %s157, %s160
      %p166 = scmp.eq.s32.totalorder %s16, 0
      %p167 = por %p165, %p166
      %p168 = scmp.ne.s32.totalorder %s157, %s160
      %p169 = scmp.eq.s32.totalorder %s21, 2
      %p170 = por %p168, %p169
      %p171 = scmp.ne.s32.totalorder %s160, %s161
      %p172 = scmp.eq.s32.totalorder %s21, 0
      %p173 = por %p171, %p172
      %p174 = scmp.ne.s32.totalorder %s160, %s161
      %p175 = scmp.eq.s32.totalorder %s22, 2
      %p176 = por %p174, %p175
      %p178 = scmp.ne.s32.totalorder %s161, %s177
      %p179 = scmp.eq.s32.totalorder %s22, 0
      %p180 = por %p178, %p179
      %p181 = scmp.le.s32.totalorder 1, %s16
      %p182 = scmp.lt.s32.totalorder %s16, 4
      %p183 = pnand %p181, %p182
      %p184 = pneg %p183
      // Predicated region
      $region9: #{tpu_custom_call.1} parent=5 // pred_check
        _
      $region10: #{tpu_custom_call.1} parent=5 // pred_check_branch
        %186 = sbr.rel (%p183) target = $region12
      $region11: #{tpu_custom_call.1} parent=5 // pred_region
        %s187 = ssub.s32 %s16, 1
        // Predicated region
        $region13: #{tpu_custom_call.1} parent=11 // pred_check
          %p188 = pneg %p63
        $region14: #{tpu_custom_call.1} parent=11 // pred_check_branch
          %190 = sbr.rel (%p188) target = $region16
        $region15: #{tpu_custom_call.1} parent=11 // pred_region
          _
        $region16: #{tpu_custom_call.1} parent=11 // pred_fallthru
          _
        // Predicated region
        $region17: #{tpu_custom_call.1} parent=11 // pred_check
          %p191 = pneg %p84
        $region18: #{tpu_custom_call.1} parent=11 // pred_check_branch
          %193 = sbr.rel (%p191) target = $region20
        $region19: #{tpu_custom_call.1} parent=11 // pred_region
          _
        $region20: #{tpu_custom_call.1} parent=11 // pred_fallthru
          _
        // Predicated region
        $region21: #{tpu_custom_call.1} parent=11 // pred_check
          %p194 = pneg %p105
        $region22: #{tpu_custom_call.1} parent=11 // pred_check_branch
          %196 = sbr.rel (%p194) target = $region24
        $region23: #{tpu_custom_call.1} parent=11 // pred_region
          _
        $region24: #{tpu_custom_call.1} parent=11 // pred_fallthru
          _
        // Predicated region
        $region25: #{tpu_custom_call.1} parent=11 // pred_check
          %p197 = pneg %p126
        $region26: #{tpu_custom_call.1} parent=11 // pred_check_branch
          %199 = sbr.rel (%p197) target = $region28
        $region27: #{tpu_custom_call.1} parent=11 // pred_region
          _
        $region28: #{tpu_custom_call.1} parent=11 // pred_fallthru
          _
        // Predicated region
        $region29: #{tpu_custom_call.1} parent=11 // pred_check
          %p200 = pneg %p147
        $region30: #{tpu_custom_call.1} parent=11 // pred_check_branch
          %202 = sbr.rel (%p200) target = $region32
        $region31: #{tpu_custom_call.1} parent=11 // pred_region
          _
        $region32: #{tpu_custom_call.1} parent=11 // pred_fallthru
          _
      $region12: #{tpu_custom_call.1} parent=5 // pred_fallthru
        _
      %p203 = scmp.lt.s32.totalorder %s16, 3
      // Predicated region
      $region33: #{tpu_custom_call.1} parent=5 // pred_check
        %p204 = pneg %p203
      $region34: #{tpu_custom_call.1} parent=5 // pred_check_branch
        %206 = sbr.rel (%p204) target = $region36
      $region35: #{tpu_custom_call.1} parent=5 // pred_region
        // Predicated region
        $region37: #{tpu_custom_call.1} parent=35 // pred_check
          %p207 = pneg %p36
        $region38: #{tpu_custom_call.1} parent=35 // pred_check_branch
          %209 = sbr.rel (%p207) target = $region40
        $region39: #{tpu_custom_call.1} parent=35 // pred_region
          %p210 = scmp.lt.s32.totalorder %s16, 2
          %s211 = scalar_select %p210, %s16, 2
          %s212 = smul.addr %s211, 2
          %s213 = scalar_lea.vmem %s0, %s212
        $region40: #{tpu_custom_call.1} parent=35 // pred_fallthru
          _
      $region36: #{tpu_custom_call.1} parent=5 // pred_fallthru
        _
      %p214 = scmp.le.s32.totalorder 1, %s16
      %p215 = scmp.lt.s32.totalorder %s16, 4
      %p216 = pnand %p214, %p215
      %p217 = pneg %p216
      // Predicated region
      $region41: #{tpu_custom_call.1} parent=5 // pred_check
        _
      $region42: #{tpu_custom_call.1} parent=5 // pred_check_branch
        %219 = sbr.rel (%p216) target = $region44
      $region43: #{tpu_custom_call.1} parent=5 // pred_region
        %s220 = ssub.s32 %s16, 1
        %p221 = scmp.lt.s32.totalorder %s21, 2
        %s222 = scalar_select %p221, %s21, 2
        %s223 = smul.addr %s222, 2
        %s224 = scalar_lea.vmem %s0, %s223
        %p225 = pneg %p42
        %p226 = pneg %p39
        %p227 = pneg %p63
        %p228 = pneg %p60
        %p229 = pneg %p84
        %p230 = pneg %p81
        %p231 = pneg %p105
        %p232 = pneg %p102
        %p233 = pneg %p126
        %p234 = pneg %p123
        %p235 = pneg %p147
        %p236 = pneg %p144
        %p237 = pneg %p173
        %p238 = pneg %p170
        %s239 = sand.u32 %s160, 1
        %s240 = scalar_lea.sflag [#allocation4], %s239
        %s241 = sand.u32 %s160, 1
        %s242 = scalar_lea.vmem [#allocation3], %s241
        %p243 = scmp.lt.s32.totalorder %s21, 2
        %s244 = scalar_select %p243, %s21, 2
        %s245 = smul.addr %s244, 2
        %s246 = scalar_lea.vmem %s0, %s245
        %v247 = vld [vmem:[%s246] sm:$0x1]
        %v248 = vld [vmem:[%s246 + $0x1] sm:$0x1]
        %v249 = vmul.f32 %v247, %v247
        %v250 = vmul.f32 %v248, %v248
        %v251 = vadd.f32 %v249, %v250
        %v252 = vrsqrt.pop %v251
        %v253 = vmul.f32 %v251, %v252
        %vm254 = vcmp.eq.f32.partialorder %v251, inf
        %v255 = vsel %vm254, %v251, %v253
        %vm256 = vcmp.eq.f32.partialorder %v251, 0.0
        %v257 = vand.u32 %v251, 2147483648
        %v258 = vsel %vm256, %v257, %v255
        %v259 = vand.u32 2147483647, %v247
        %v260 = vand.u32 2147483647, %v248
        %v261 = vmin.f32 %v259, %v260
        %v262 = vmax.f32 %v259, %v260
        %v263 = vrcp.pop %v262
        %v264 = vmul.f32 %v261, %v263
        %v265 = vmul.f32 %v264, %v264
        %v266 = vmul.f32 0.002785687, %v265
        %v267 = vadd.f32 %v266, -0.015866
        %v268 = vmul.f32 %v267, %v265
        %v269 = vadd.f32 %v268, 0.04247222
        %v270 = vmul.f32 %v269, %v265
        %v271 = vadd.f32 %v270, -0.074975304
        %v272 = vmul.f32 %v271, %v265
        %v273 = vadd.f32 %v272, 0.1064488
        %v274 = vmul.f32 %v273, %v265
        %v275 = vadd.f32 %v274, -0.14207031
        %v276 = vmul.f32 %v275, %v265
        %v277 = vadd.f32 %v276, 0.19993454
        %v278 = vmul.f32 %v277, %v265
        %v279 = vadd.f32 %v278, -0.33333147
        %v280 = vmul.f32 %v279, %v265
        %v281 = vmul.f32 %v280, %v264
        %v282 = vadd.f32 %v281, %v264
        %vm283 = vcmp.gt.f32.partialorder %v260, %v259
        %v284 = vsub.f32 1.5707964, %v282
        %v285 = vsel %vm283, %v284, %v282
        %vm286 = vcmp.lt.f32.partialorder %v247, 0.0
        %v287 = vsub.f32 3.1415927, %v285
        %v288 = vsel %vm286, %v287, %v285
        %vm289 = vcmp.lt.s32.totalorder %v247, 0
        %v290 = vsel %vm289, 3.1415927, 0.0
        %vm291 = vcmp.eq.f32.partialorder %v248, 0.0
        %v292 = vsel %vm291, %v290, %v288
        %vm293 = vcmp.ne.f32.partialorder %v247, %v247
        %vm294 = vcmp.ne.f32.partialorder %v248, %v248
        %vm295 = vmor %vm293, %vm294
        %v296 = vsel %vm295, nan, %v292
        %vm297 = vcmp.lt.f32.partialorder %v247, 0.0
        %v298 = vsel %vm297, 2.3561945, 0.7853982
        %vm299 = vcmp.eq.s32.totalorder %v259, inf
        %vm300 = vcmp.eq.s32.totalorder %v260, inf
        %vm301 = vmand %vm299, %vm300
        %v302 = vsel %vm301, %v298, %v296
        %v303 = vand.u32 2147483647, %v302
        %v304 = vand.u32 %v248, 2147483648
        %v305 = vor.u32 %v303, %v304
        %v306 = vld [vmem:[%s1] sm:$0xff]
        %v307 = vld [vmem:[%s1 + $0x8] sm:$0xff]
        %v308 = vld [vmem:[%s1 + $0x10] sm:$0xff]
        %v309 = vld [vmem:[%s1 + $0x18] sm:$0xff]
        %311 = vset.pattern.permute.xlu0 0
        %312 = vperm.xlu0 %311, %v306
        %v313 = vpop.permute.xlu0 %312
        %316 = vset.pattern.permute.xlu0 0
        %317 = vperm.xlu0 %316, %v307
        %v318 = vpop.permute.xlu0 %317
        %321 = vset.pattern.permute.xlu0 0
        %322 = vperm.xlu0 %321, %v308
        %v323 = vpop.permute.xlu0 %322
        %326 = vset.pattern.permute.xlu0 0
        %327 = vperm.xlu0 %326, %v309
        %v328 = vpop.permute.xlu0 %327
        %v330 = vlaneseq
        %v331 = vshrl.u32 %v330, 7
        %v332 = vsub.s32 0, %v331
        %v333 = vrot.slane %v258, %v332
        %v334 = vmul.f32 %v313, %v333
        %v335 = vmul.f32 %v318, %v333
        %v336 = vmul.f32 %v323, %v333
        %v337 = vmul.f32 %v328, %v333
        %v338 = vld [vmem:[%s2] sm:$0xff]
        %v339 = vld [vmem:[%s2 + $0x8] sm:$0xff]
        %v340 = vld [vmem:[%s2 + $0x10] sm:$0xff]
        %v341 = vld [vmem:[%s2 + $0x18] sm:$0xff]
        %343 = vset.pattern.permute.xlu0 0
        %344 = vperm.xlu0 %343, %v338
        %v345 = vpop.permute.xlu0 %344
        %348 = vset.pattern.permute.xlu0 0
        %349 = vperm.xlu0 %348, %v339
        %v350 = vpop.permute.xlu0 %349
        %353 = vset.pattern.permute.xlu0 0
        %354 = vperm.xlu0 %353, %v340
        %v355 = vpop.permute.xlu0 %354
        %358 = vset.pattern.permute.xlu0 0
        %359 = vperm.xlu0 %358, %v341
        %v360 = vpop.permute.xlu0 %359
        %v362 = vlaneseq
        %v363 = vshrl.u32 %v362, 7
        %v364 = vsub.s32 0, %v363
        %v365 = vrot.slane %v305, %v364
        %v366 = vmul.f32 %v345, %v365
        %v367 = vmul.f32 %v350, %v365
        %v368 = vmul.f32 %v355, %v365
        %v369 = vmul.f32 %v360, %v365
        %v370 = vadd.f32 %v334, %v366
        %v371 = vadd.f32 %v335, %v367
        %v372 = vadd.f32 %v336, %v368
        %v373 = vadd.f32 %v337, %v369
        %v374 = vld [vmem:[%s3] sm:$0xff]
        %v375 = vld [vmem:[%s3 + $0x8] sm:$0xff]
        %v376 = vld [vmem:[%s3 + $0x10] sm:$0xff]
        %v377 = vld [vmem:[%s3 + $0x18] sm:$0xff]
        %379 = vset.pattern.permute.xlu0 0
        %380 = vperm.xlu0 %379, %v374
        %v381 = vpop.permute.xlu0 %380
        %384 = vset.pattern.permute.xlu0 0
        %385 = vperm.xlu0 %384, %v375
        %v386 = vpop.permute.xlu0 %385
        %389 = vset.pattern.permute.xlu0 0
        %390 = vperm.xlu0 %389, %v376
        %v391 = vpop.permute.xlu0 %390
        %394 = vset.pattern.permute.xlu0 0
        %395 = vperm.xlu0 %394, %v377
        %v396 = vpop.permute.xlu0 %395
        %v398 = vadd.f32 %v370, %v381
        %v399 = vadd.f32 %v371, %v386
        %v400 = vadd.f32 %v372, %v391
        %v401 = vadd.f32 %v373, %v396
        %v402 = vtanh.pop %v398
        %v403 = vtanh.pop %v399
        %v404 = vtanh.pop %v400
        %v405 = vtanh.pop %v401
        %v406 = vld [vmem:[%s4] sm:$0xff]
        %v407 = vld [vmem:[%s4 + $0x8] sm:$0xff]
        %v408 = vld [vmem:[%s4 + $0x10] sm:$0xff]
        %v409 = vld [vmem:[%s4 + $0x18] sm:$0xff]
        %411 = vset.pattern.permute.xlu0 0
        %412 = vperm.xlu0 %411, %v406
        %v413 = vpop.permute.xlu0 %412
        %416 = vset.pattern.permute.xlu0 0
        %417 = vperm.xlu0 %416, %v407
        %v418 = vpop.permute.xlu0 %417
        %421 = vset.pattern.permute.xlu0 0
        %422 = vperm.xlu0 %421, %v408
        %v423 = vpop.permute.xlu0 %422
        %426 = vset.pattern.permute.xlu0 0
        %427 = vperm.xlu0 %426, %v409
        %v428 = vpop.permute.xlu0 %427
        %v430 = vmul.f32 %v402, %v413
        %v431 = vmul.f32 %v403, %v418
        %v432 = vmul.f32 %v404, %v423
        %v433 = vmul.f32 %v405, %v428
        %v434 = vadd.f32 %v430, %v431
        %v435 = vadd.f32 %v434, %v432
        %v436 = vadd.f32 %v435, %v433
        %v437 = vrot.slane %v436, 4
        %v438 = vadd.f32 %v436, %v437
        %v439 = vrot.slane %v438, 2
        %v440 = vadd.f32 %v438, %v439
        %v441 = vrot.slane %v440, 1
        %v442 = vadd.f32 %v440, %v441
        %s443 = sld [smem:[#allocation2]]
        %v444 = vstv %s443
        %v445 = vadd.f32 %v442, %v444
        %v446 = vmul.f32 %v445, 0.5
        %v447 = vtanh.pop %v446
        %v448 = vmul.f32 %v447, 0.5
        %v449 = vadd.f32 %v448, 0.5
        %450 = vst [vmem:[%s242] sm:$0x1] %v449
        %s451 = sand.u32 %s160, 1
        %s452 = scalar_lea.sflag [#allocation4], %s451
        %s453 = sand.u32 %s160, 1
        %s454 = scalar_lea.vmem [#allocation3], %s453
        // Predicated region
        $region45: #{tpu_custom_call.1} parent=43 // pred_check
          %p455 = pneg %p170
        $region46: #{tpu_custom_call.1} parent=43 // pred_check_branch
          %457 = sbr.rel (%p455) target = $region48
        $region47: #{tpu_custom_call.1} parent=43 // pred_region
          %s459 = ssub.s32 16, 16
          %460 = vsyncadd %s452, %s459
          %s461 = smul.addr %s21, 16
          %s462 = scalar_lea.hbm %s6, %s461
          %s464 = sshll.u32 %s454, 4
          %s465 = int_to_ptr.vmem [resolvable:$true] %s464
          %467 = dma.vmem_to_hbm [thread:$0]  %s465, 16, %s462, %s452
        $region48: #{tpu_custom_call.1} parent=43 // pred_fallthru
          _
      $region44: #{tpu_custom_call.1} parent=5 // pred_fallthru
        _
      %p468 = scmp.le.s32.totalorder 2, %s16
      // Predicated region
      $region49: #{tpu_custom_call.1} parent=5 // pred_check
        %p469 = pneg %p468
      $region50: #{tpu_custom_call.1} parent=5 // pred_check_branch
        %471 = sbr.rel (%p469) target = $region52
      $region51: #{tpu_custom_call.1} parent=5 // pred_region
        %s472 = ssub.s32 %s16, 2
        // Predicated region
        $region53: #{tpu_custom_call.1} parent=51 // pred_check
          %p473 = pneg %p176
        $region54: #{tpu_custom_call.1} parent=51 // pred_check_branch
          %475 = sbr.rel (%p473) target = $region56
        $region55: #{tpu_custom_call.1} parent=51 // pred_region
          %s476 = sand.u32 %s161, 1
          %s477 = scalar_lea.sflag [#allocation4], %s476
          %s478 = sand.u32 %s161, 1
          %s479 = scalar_lea.vmem [#allocation3], %s478
          %480 = dma.done %s477, 16
        $region56: #{tpu_custom_call.1} parent=51 // pred_fallthru
          _
      $region52: #{tpu_custom_call.1} parent=5 // pred_fallthru
        _
    $region6: #{tpu_custom_call.1} parent=1 // loop_footer
      %s20 = sadd.s32 1, %s16
    $region7: #{tpu_custom_call.1} parent=1 // loop_footer_branch
      %15 = sbr.rel target = $region3
    $region8: #{tpu_custom_call.1} parent=1 // loop_exit
      _
    %481 = vsyncpa [#allocation4], 1
    %s482 = scalar_lea.sflag [#allocation4], 1
    %483 = vsyncpa %s482, 1

</llo_original>
